<compile_context>
chip_gen: v7x
topology: tpu7x:2x2x1
jax: 0.10.0
libtpu: 0.0.40
codegen_flags: <defaults>
</compile_context>

<pallas_src>
import jax
import jax.numpy as jnp
from jax.experimental import pallas as pl
from jax.experimental.pallas import tpu as pltpu


def _round_up(n, m):
    return ((n + m - 1) // m) * m


def _device_kind():
    try:
        return jax.devices()[0].device_kind.lower()
    except Exception:
        return ""


def _pick_batch_tile(batch, block_b):
    """Batch tile satisfying TPU layout rules while avoiding large padding waste."""
    base = _round_up(batch, 8)
    if base <= block_b:
        return base                       # single tile == (padded) full batch dim
    tb = _round_up(block_b, 128)          # multi-tile: last-dim blocks must be 128-aligned
    # Shrink while padding waste exceeds ~12.5% of batch (review: avoid near-2x padding).
    while tb > 128 and (_round_up(batch, tb) - batch) * 8 > batch:
        tb = max(128, (tb // 2) // 128 * 128)
    return tb


def _vmem_limit_bytes(tb, f_dim, vpad, dp):
    """Generation-aware VMEM budget derived from actual buffer sizes."""
    idx_bytes = 2 * f_dim * tb * 4                    # double-buffered int32 index tiles
    tab_bytes = 1 * f_dim * vpad * dp * 2             # single-buffered bf16 table (Buffered(1))
    out_bytes = 2 * tb * dp * 4                       # double-buffered f32 output tiles
    tmp_bytes = f_dim * tb * vpad * (4 + 2) + f_dim * tb * dp * 4  # iota + onehot + per_f
    needed = idx_bytes + tab_bytes + out_bytes + tmp_bytes
    ceiling = (56 if "v7" in _device_kind() else 110) * 1024 * 1024
    return max(min(int(needed * 1.5) + (2 << 20), ceiling), 16 << 20)


def _discrete_embedding_kernel(idx_ref, tab_ref, out_ref):
    # idx_ref: (F, tb) int32 raw per-feature indices (transposed in the wrapper)
    # tab_ref: (F, Vpad, Dp) bf16, VMEM-resident (constant index_map, 1 buffer)
    # out_ref: (tb, Dp) f32
    f_dim, tb = idx_ref.shape
    vpad = tab_ref.shape[1]

    idx = idx_ref[...]                                              # (F, tb)
    # Out-of-range indices contribute zero (vs. gather semantics); assert under
    # pl.enable_debug_checks(), no-op in production.
    pl.debug_check(jnp.all((idx >= 0) & (idx < vpad)),
                   "DiscreteEmbedding: index out of range")

    # ONE loop-invariant iota + ONE compare + ONE cast (the VALU-bound fix).
    iota_v = jax.lax.broadcasted_iota(jnp.int32, (f_dim, tb, vpad), 2)
    onehot = (iota_v == idx[:, :, None]).astype(tab_ref.dtype)      # (F, tb, Vpad) bf16

    # F batched MXU matmuls (bf16 in, f32 accumulate), then a small F-way VPU sum.
    per_f = jnp.einsum("fbv,fvd->fbd", onehot, tab_ref[...],
                       preferred_element_type=jnp.float32)          # (F, tb, Dp)
    out_ref[...] = jnp.sum(per_f, axis=0)


def discrete_embedding(x, tables, *, block_b=None):
    """x: (B, F) int; tables: (F, Vmax, D) f32 -> (B, D) f32."""
    batch, num_features = x.shape
    f_dim, vmax, d_model = tables.shape
    assert f_dim == num_features

    # --- layout-friendly padding (wrapper side) ---
    vpad = _round_up(vmax, 16)            # bf16 sublane tile; NOT 128 (avoids MAC blow-up)
    if d_model % 128 == 0 or d_model < 128:
        dp = d_model                      # full-dim output block; no inflated HBM writes at small D
    else:
        dp = _round_up(d_model, 128)      # lane-dense stores for large, unaligned D

    tab = tables.astype(jnp.bfloat16)
    if vpad != vmax or dp != d_model:
        tab = jnp.pad(tab, ((0, 0), (0, vpad - vmax), (0, dp - d_model)))

    # Indices go in transposed as (F, B): one compare vs. a (F, tb, Vpad) iota
    # in-kernel; no per-feature offsetting needed.
    x_t = jnp.transpose(x.astype(jnp.int32))                        # (F, B)

    # --- generation-aware batch tiling ---
    if block_b is None:
        block_b = 512 if "v7" in _device_kind() else 1024
    tb = _pick_batch_tile(batch, block_b)
    b_pad = _round_up(batch, tb)
    if b_pad != batch:
        # Padded rows carry index 0 (select real row 0); sliced off below.
        x_t = jnp.pad(x_t, ((0, 0), (0, b_pad - batch)))
    grid = (b_pad // tb,)

    cost = pl.CostEstimate(
        flops=2 * b_pad * f_dim * vpad * dp,
        transcendentals=0,
        bytes_accessed=f_dim * vpad * dp * 2 + b_pad * f_dim * 4 + b_pad * dp * 4,
    )

    out = pl.pallas_call(
        _discrete_embedding_kernel,
        out_shape=jax.ShapeDtypeStruct((b_pad, dp), jnp.float32),
        grid_spec=pltpu.PrefetchScalarGridSpec(
            num_scalar_prefetch=0,
            grid=grid,
            in_specs=[
                pl.BlockSpec((f_dim, tb), lambda i: (0, i)),
                # Constant index_map: table fetched once, stays VMEM-resident.
                # Buffered(1) drops the dead second buffer (v7x VMEM budget).
                pl.BlockSpec((f_dim, vpad, dp), lambda i: (0, 0, 0),
                             pipeline_mode=pl.Buffered(1)),
            ],
            out_specs=pl.BlockSpec((tb, dp), lambda i: (i, 0)),
        ),
        compiler_params=pltpu.CompilerParams(
            # Batch tiles are independent: ~2x on v7x (2 TCs); measured-neutral
            # on single-TC v5e/v6e (kept for correctness of intent, not counted).
            dimension_semantics=("parallel",),
            vmem_limit_bytes=_vmem_limit_bytes(tb, f_dim, vpad, dp),
        ),
        cost_estimate=cost,
    )(x_t, tab)

    return out[:batch, :d_model]


def init_tables(key, d_features, d_model):
    """Xavier-uniform init per embedding table, padded to a common vocab size."""
    vmax = max(d + 1 for d in d_features)
    tables = []
    for i, d_feature in enumerate(d_features):
        vocab = d_feature + 1
        bound = (6.0 / (vocab + d_model)) ** 0.5
        k = jax.random.fold_in(key, i)
        w = jax.random.uniform(
            k, (vocab, d_model), dtype=jnp.float32, minval=-bound, maxval=bound
        )
        # Pad the vocab axis with zeros (never selected by valid indices).
        w = jnp.pad(w, ((0, vmax - vocab), (0, 0)))
        tables.append(w)
    return jnp.stack(tables, axis=0)  # (F, Vmax, D)


def discrete_embedding_ref(x, tables):
    """Pure-JAX reference: per-feature gather, summed over features."""
    f = x.shape[1]
    outs = [tables[i][x[:, i]] for i in range(f)]
    return jnp.sum(jnp.stack(outs, axis=0), axis=0)


if __name__ == "__main__":
    key = jax.random.PRNGKey(0)
    d_model = 32
    d_features = [5, 7, 3, 9]  # per-feature vocab sizes (tables: d_feature+1 rows)
    batch = 8
    num_features = len(d_features)

    tab_key, idx_key = jax.random.split(key)
    tables = init_tables(tab_key, d_features, d_model)  # (F, Vmax, D)

    # Valid indices per feature: 0 .. d_feature (inclusive)
    cols = []
    for i, d_feature in enumerate(d_features):
        k = jax.random.fold_in(idx_key, i)
        cols.append(
            jax.random.randint(
                k, (batch,), minval=0, maxval=d_feature + 1, dtype=jnp.int32
            )
        )
    x = jnp.stack(cols, axis=1)  # (batch, num_features)

    out = discrete_embedding(x, tables)
    out = jax.block_until_ready(out)
    assert out.shape == (batch, d_model)

    # Tight check vs. a reference using bf16-rounded tables (the multi-hot is
    # exact in bf16; only table precision changed), plus a loose f32 check.
    ref_bf16 = discrete_embedding_ref(
        x, tables.astype(jnp.bfloat16).astype(jnp.float32)
    )
    ref_f32 = discrete_embedding_ref(x, tables)
    assert jnp.allclose(out, ref_bf16, atol=1e-5, rtol=1e-5)
    assert jnp.allclose(out, ref_f32, atol=5e-2, rtol=5e-2)

    print("KERNEL_OK")
</pallas_src>

<mosaic_0001>
module attributes {stable_mosaic.version = 11 : i64} {
  func.func @_discrete_embedding_kernel(%arg0: i32, %arg1: memref<4x8xi32, #tpu.memory_space<vmem>>, %arg2: memref<4x16x32xbf16, #tpu.memory_space<vmem>>, %arg3: memref<8x32xf32, #tpu.memory_space<vmem>>) attributes {dimension_semantics = [#tpu.dimension_semantics<parallel>], iteration_bounds = array<i64: 1>, scalar_prefetch = 0 : i64, scratch_operands = 0 : i64, tpu.core_type = #tpu.core_type<tc>, window_params = [{transform_indices = @transform_0, window_bounds = array<i64: 4, 8>}, {pipeline_mode = #tpu.pipeline_mode<synchronous>, transform_indices = @transform_1, window_bounds = array<i64: 4, 16, 32>}, {transform_indices = @transform_2, window_bounds = array<i64: 8, 32>}]} {
    %c0 = arith.constant 0 : index
    %c0_0 = arith.constant 0 : index
    %0 = vector.load %arg1[%c0, %c0_0] : memref<4x8xi32, #tpu.memory_space<vmem>>, vector<4x8xi32>
    %c0_i32 = arith.constant 0 : i32
    %1 = vector.broadcast %c0_i32 : i32 to vector<4x8xi32>
    %2 = arith.cmpi sge, %0, %1 : vector<4x8xi32>
    %c16_i32 = arith.constant 16 : i32
    %3 = vector.broadcast %c16_i32 : i32 to vector<4x8xi32>
    %4 = arith.cmpi slt, %0, %3 : vector<4x8xi32>
    %5 = arith.andi %2, %4 : vector<4x8xi1>
    %cst = arith.constant 1.000000e+00 : f32
    %cst_1 = arith.constant 0.000000e+00 : f32
    %6 = vector.broadcast %cst : f32 to vector<4x8xf32>
    %7 = vector.broadcast %cst_1 : f32 to vector<4x8xf32>
    %8 = arith.select %5, %6, %7 : vector<4x8xi1>, vector<4x8xf32>
    %9 = vector.shape_cast %8 : vector<4x8xf32> to vector<1x4x8xf32>
    %cst_2 = arith.constant dense<0x7F800000> : vector<1xf32>
    %10 = vector.multi_reduction <minimumf>, %9, %cst_2 [1, 2] : vector<1x4x8xf32> to vector<1xf32>
    %11 = vector.shape_cast %10 : vector<1xf32> to vector<1x1x1xf32>
    %12 = vector.extract %11[0, 0, 0] : f32 from vector<1x1x1xf32>
    %cst_3 = arith.constant 0.000000e+00 : f32
    %13 = arith.cmpf ogt, %12, %cst_3 : f32
    %true = arith.constant true
    %14 = arith.xori %13, %true : i1
    %false = arith.constant false
    %15 = arith.ori %false, %14 : i1
    %false_4 = arith.constant false
    %c1_i32 = arith.constant 1 : i32
    %c-1_i32 = arith.constant -1 : i32
    %16 = arith.select %false_4, %c-1_i32, %c1_i32 : i32
    %17 = tpu.iota {dimensions = array<i32: 2>} : vector<4x8x16xi32>
    %18 = vector.shape_cast %0 : vector<4x8xi32> to vector<4x8x1xi32>
    %19 = vector.broadcast %18 : vector<4x8x1xi32> to vector<4x8x16xi32>
    %20 = arith.cmpi eq, %17, %19 : vector<4x8x16xi32>
    %21 = arith.extui %20 : vector<4x8x16xi1> to vector<4x8x16xi32>
    %22 = arith.sitofp %21 : vector<4x8x16xi32> to vector<4x8x16xf32>
    %23 = arith.truncf %22 : vector<4x8x16xf32> to vector<4x8x16xbf16>
    %c0_5 = arith.constant 0 : index
    %c0_6 = arith.constant 0 : index
    %c0_7 = arith.constant 0 : index
    %24 = vector.load %arg2[%c0_5, %c0_6, %c0_7] : memref<4x16x32xbf16, #tpu.memory_space<vmem>>, vector<4x16x32xbf16>
    "tpu.trace_start"() <{level = 10 : i32, message = "fbv,fvd->fbd"}> : () -> ()
    %cst_8 = arith.constant dense<0.000000e+00> : vector<4x8x32xf32>
    %25 = tpu.matmul %23, %24, %cst_8 {dimension_numbers = #tpu.dot_dimension_numbers<[2], [1], [1], [2], [0, 0, 0, 1, 1, 2], [0], [0]>} : vector<4x8x16xbf16>, vector<4x16x32xbf16>, vector<4x8x32xf32> -> vector<4x8x32xf32>
    "tpu.trace_stop"() : () -> ()
    %cst_9 = arith.constant dense<0.000000e+00> : vector<8x32xf32>
    %26 = vector.multi_reduction <add>, %25, %cst_9 [0] : vector<4x8x32xf32> to vector<8x32xf32>
    %c0_10 = arith.constant 0 : index
    %c0_11 = arith.constant 0 : index
    %27 = vector.load %arg3[%c0_10, %c0_11] : memref<8x32xf32, #tpu.memory_space<vmem>>, vector<8x32xf32>
    tpu.vector_store %arg3[%c0_10, %c0_11], %26 {strides = array<i32>} : memref<8x32xf32, #tpu.memory_space<vmem>>, vector<8x32xf32>,
    return
  }
  func.func @transform_0(%arg0: i32) -> (i32, i32) {
    %c0_i32 = arith.constant 0 : i32
    %c0_i32_0 = arith.constant 0 : i32
    return %c0_i32, %arg0 : i32, i32
  }
  func.func @transform_1(%arg0: i32) -> (i32, i32, i32) {
    %c0_i32 = arith.constant 0 : i32
    %c0_i32_0 = arith.constant 0 : i32
    %c0_i32_1 = arith.constant 0 : i32
    %c0_i32_2 = arith.constant 0 : i32
    return %c0_i32, %c0_i32_0, %c0_i32_1 : i32, i32, i32
  }
  func.func @transform_2(%arg0: i32) -> (i32, i32) {
    %c0_i32 = arith.constant 0 : i32
    %c0_i32_0 = arith.constant 0 : i32
    return %arg0, %c0_i32 : i32, i32
  }
}

</mosaic_0001>

<llo_original>
// kernel: tpu_custom_call.1
$region0: #{tpu_custom_call.1}
  #allocation0 [shape = 'u32[]', space=smem, size = 0x4, offset = 0x4, fixed_abs, tag = 'smem constant byte address 0x4 - core index']
  #allocation1 [shape = 'u32[144,128]{1,0:T(1,128)}', space=vmem, size = 0x12000, scoped, tag = 'internal scratch']
  %s0 = inlined_call_operand.hbm [shape: s32[4,8], index: 0, kind: input, shape index: {}]
  %s1 = inlined_call_operand.hbm [shape: bf16[4,16,32], index: 1, kind: input, shape index: {}]
  %s2 = inlined_call_operand.hbm [shape: f32[8,32], index: 2, kind: output, shape index: {}]
  %s3 = sld [smem:[#allocation0]]
  $region26: #{tpu_custom_call.1} parent=0
    _
  %s5 = ssub.s32 1, %s3
  %s6 = scalar_select 0, %s5, %s3
  $region1: #{tpu_custom_call.1} parent=0
    #allocation2 [shape = 'u8[2048]{0}', space=vmem, size = 0x800, scoped, tag = 'input window, operand 0, single buffered']
    #allocation3 [shape = 's32[1]{0}', space=sflag, size = 0x4, scoped, tag = 'scoped memory for tpu_custom_call.1']
    #allocation4 [shape = 's32[1]{0}', space=sflag, size = 0x4, scoped, tag = 'scoped memory for tpu_custom_call.1']
    #allocation5 [shape = 'u8[16384]{0}', space=vmem, size = 0x4000, scoped, tag = 'input window, operand 1, single buffered']
    #allocation6 [shape = 's32[1]{0}', space=sflag, size = 0x4, scoped, tag = 'scoped memory for tpu_custom_call.1']
    #allocation7 [shape = 'u8[4096]{0}', space=vmem, size = 0x1000, scoped, tag = 'output window, operand 0, single buffered']
    %7 = vsyncpa [#allocation3], 0
    %8 = vsyncpa [#allocation6], 0
    %9 = vsyncpa [#allocation4], 0
    // Predicated region
    $region2: #{tpu_custom_call.1} parent=1 // pred_check
      _
    $region3: #{tpu_custom_call.1} parent=1 // pred_check_branch
      %11 = sbr.rel (0) target = $region5
    $region4: #{tpu_custom_call.1} parent=1 // pred_region
      %s13 = ssub.s32 64, 64
      %14 = vsyncadd [#allocation3], %s13
      %s16 = sshll.u32 [#allocation2], 4
      %s17 = int_to_ptr.vmem [resolvable:$true] %s16
      %19 = dma.hbm_to_vmem [thread:$0]  %s0, 64, %s17, [#allocation3]
    $region5: #{tpu_custom_call.1} parent=1 // pred_fallthru
      _
    // Predicated region
    $region6: #{tpu_custom_call.1} parent=1 // pred_check
      _
    $region7: #{tpu_custom_call.1} parent=1 // pred_check_branch
      %21 = sbr.rel (0) target = $region9
    $region8: #{tpu_custom_call.1} parent=1 // pred_region
      %s23 = ssub.s32 512, 512
      %24 = vsyncadd [#allocation6], %s23
      %s25 = sshll.u32 [#allocation5], 4
      %s26 = int_to_ptr.vmem [resolvable:$true] %s25
      %31 = dma.hbm_to_vmem [thread:$0]  %s1, 512, %s26, [#allocation6], 64, 64, 4
    $region9: #{tpu_custom_call.1} parent=1 // pred_fallthru
      _
    // Predicated region
    $region10: #{tpu_custom_call.1} parent=1 // pred_check
      _
    $region11: #{tpu_custom_call.1} parent=1 // pred_check_branch
      %33 = sbr.rel (0) target = $region13
    $region12: #{tpu_custom_call.1} parent=1 // pred_region
      %34 = dma.done [#allocation3], 64
    $region13: #{tpu_custom_call.1} parent=1 // pred_fallthru
      _
    // Predicated region
    $region14: #{tpu_custom_call.1} parent=1 // pred_check
      _
    $region15: #{tpu_custom_call.1} parent=1 // pred_check_branch
      %36 = sbr.rel (0) target = $region17
    $region16: #{tpu_custom_call.1} parent=1 // pred_region
      %37 = dma.done [#allocation6], 512
    $region17: #{tpu_custom_call.1} parent=1 // pred_fallthru
      _
    %v39 = vld [vmem:[#allocation2] sm:$0xf]
    %v40 = vlaneseq
    %v41 = vand.u32 %v40, 127
    %v42 = vlaneseq
    %v43 = vshrl.u32 %v42, 7
    %v44 = vsub.s32 0, %v43
    %v45 = vrot.slane %v39, %v44
    %47 = vbcast.lane.b32.xlu0 %v45, 256
    %v48 = vpop.permute.xlu0 %47
    %v49 = vlaneseq
    %v50 = vshrl.u32 %v49, 7
    %v51 = vsub.s32 1, %v50
    %v52 = vrot.slane %v39, %v51
    %54 = vbcast.lane.b32.xlu0 %v52, 256
    %v55 = vpop.permute.xlu0 %54
    %v56 = vlaneseq
    %v57 = vshrl.u32 %v56, 7
    %v58 = vsub.s32 2, %v57
    %v59 = vrot.slane %v39, %v58
    %61 = vbcast.lane.b32.xlu0 %v59, 256
    %v62 = vpop.permute.xlu0 %61
    %v63 = vlaneseq
    %v64 = vshrl.u32 %v63, 7
    %v65 = vsub.s32 3, %v64
    %v66 = vrot.slane %v39, %v65
    %68 = vbcast.lane.b32.xlu0 %v66, 256
    %v69 = vpop.permute.xlu0 %68
    %vm70 = vcmp.eq.s32.totalorder %v41, %v48
    %vm71 = vcmp.eq.s32.totalorder %v41, %v55
    %vm72 = vcmp.eq.s32.totalorder %v41, %v62
    %vm73 = vcmp.eq.s32.totalorder %v41, %v69
    %v74 = vsel %vm70, 1, 0
    %v75 = vsel %vm71, 1, 0
    %v76 = vsel %vm72, 1, 0
    %v77 = vsel %vm73, 1, 0
    %v78 = vcvt.s32.f32 %v74
    %v79 = vcvt.s32.f32 %v75
    %v80 = vcvt.s32.f32 %v76
    %v81 = vcvt.s32.f32 %v77
    %v82 = vpack.c.bf16 %v78, %v78
    %v83 = vpack.c.bf16 %v79, %v79
    %v84 = vpack.c.bf16 %v80, %v80
    %v85 = vpack.c.bf16 %v81, %v81
    %v86 = vld [vmem:[#allocation5] sm:$0xf]
    %v87 = vld [vmem:[#allocation5 + $0x4] sm:$0xf]
    %v88 = vld [vmem:[#allocation5 + $0x8] sm:$0xf]
    %v89 = vld [vmem:[#allocation5 + $0xc] sm:$0xf]
    %v90 = vld [vmem:[#allocation5 + $0x10] sm:$0xf]
    %v91 = vld [vmem:[#allocation5 + $0x14] sm:$0xf]
    %v92 = vld [vmem:[#allocation5 + $0x18] sm:$0xf]
    %v93 = vld [vmem:[#allocation5 + $0x1c] sm:$0xf]
    %v96 = vunpack.c.l.b16 %v86
    %v97 = vunpack.c.l.b16 %v87
    %v98 = vpack.c.b16 %v97, %v96
    %vm100 = vcmask 130048
    %v102 = vsel %vm100, %v82, 0
    %104 = vmatprep.subr.bf16.mxu0 0
    %105 = vmatpush1.bf16.msra.mxu0 %v98
    %106 = vmatprep.subr.bf16.mxu0 0
    %107 = vmatpush1.bf16.msra.mxu0 0
    %108 = vmatprep.subr.bf16.mxu0 0
    %109 = vmatpush1.bf16.msra.mxu0 0
    %110 = vmatprep.subr.bf16.mxu0 0
    %111 = vmatpush1.bf16.msra.mxu0 0
    %112 = vmatprep.subr.bf16.mxu0 0
    %113 = vmatpush1.bf16.msra.mxu0 0
    %114 = vmatprep.subr.bf16.mxu0 0
    %115 = vmatpush1.bf16.msra.mxu0 0
    %116 = vmatprep.subr.bf16.mxu0 0
    %117 = vmatpush1.bf16.msra.mxu0 0
    %118 = vmatprep.subr.bf16.mxu0 0
    %119 = vmatpush1.bf16.msra.mxu0 0
    %120 = vmatprep.subr.bf16.mxu0 0
    %121 = vmatpush1.bf16.msra.mxu0 0
    %122 = vmatprep.subr.bf16.mxu0 0
    %123 = vmatpush1.bf16.msra.mxu0 0
    %124 = vmatprep.subr.bf16.mxu0 0
    %125 = vmatpush1.bf16.msra.mxu0 0
    %126 = vmatprep.subr.bf16.mxu0 0
    %127 = vmatpush1.bf16.msra.mxu0 0
    %128 = vmatprep.subr.bf16.mxu0 0
    %129 = vmatpush1.bf16.msra.mxu0 0
    %130 = vmatprep.subr.bf16.mxu0 0
    %131 = vmatpush1.bf16.msra.mxu0 0
    %132 = vmatprep.subr.bf16.mxu0 0
    %133 = vmatpush1.bf16.msra.mxu0 0
    %134 = vmatprep.subr.bf16.mxu0 0
    %135 = vmatpush1.bf16.msra.mxu0 0
    %136 = vmatprep.mubr.bf16.mxu0 0
    %137 = vmatmul.mubr.bf16.gmra.mrb[0].mxu0 %v102
    %v138 = vpop.f32.mrb[0].mxu0
    %v139 = vadd.f32 0.0, %v138
    %v140 = vpop.f32.mrb[0].mxu0
    %v141 = vpop.f32.mrb[0].mxu0
    %v142 = vpop.f32.mrb[0].mxu0
    %143 = vdwg.mxu0
    %v146 = vunpack.c.l.b16 %v88
    %v147 = vunpack.c.l.b16 %v89
    %v148 = vpack.c.b16 %v147, %v146
    %v151 = vsel %vm100, %v83, 0
    %153 = vmatprep.subr.bf16.mxu0 0
    %154 = vmatpush1.bf16.msra.mxu0 %v148
    %155 = vmatprep.subr.bf16.mxu0 0
    %156 = vmatpush1.bf16.msra.mxu0 0
    %157 = vmatprep.subr.bf16.mxu0 0
    %158 = vmatpush1.bf16.msra.mxu0 0
    %159 = vmatprep.subr.bf16.mxu0 0
    %160 = vmatpush1.bf16.msra.mxu0 0
    %161 = vmatprep.subr.bf16.mxu0 0
    %162 = vmatpush1.bf16.msra.mxu0 0
    %163 = vmatprep.subr.bf16.mxu0 0
    %164 = vmatpush1.bf16.msra.mxu0 0
    %165 = vmatprep.subr.bf16.mxu0 0
    %166 = vmatpush1.bf16.msra.mxu0 0
    %167 = vmatprep.subr.bf16.mxu0 0
    %168 = vmatpush1.bf16.msra.mxu0 0
    %169 = vmatprep.subr.bf16.mxu0 0
    %170 = vmatpush1.bf16.msra.mxu0 0
    %171 = vmatprep.subr.bf16.mxu0 0
    %172 = vmatpush1.bf16.msra.mxu0 0
    %173 = vmatprep.subr.bf16.mxu0 0
    %174 = vmatpush1.bf16.msra.mxu0 0
    %175 = vmatprep.subr.bf16.mxu0 0
    %176 = vmatpush1.bf16.msra.mxu0 0
    %177 = vmatprep.subr.bf16.mxu0 0
    %178 = vmatpush1.bf16.msra.mxu0 0
    %179 = vmatprep.subr.bf16.mxu0 0
    %180 = vmatpush1.bf16.msra.mxu0 0
    %181 = vmatprep.subr.bf16.mxu0 0
    %182 = vmatpush1.bf16.msra.mxu0 0
    %183 = vmatprep.subr.bf16.mxu0 0
    %184 = vmatpush1.bf16.msra.mxu0 0
    %185 = vmatprep.mubr.bf16.mxu0 0
    %186 = vmatmul.mubr.bf16.gmra.mrb[0].mxu0 %v151
    %v187 = vpop.f32.mrb[0].mxu0
    %v188 = vadd.f32 0.0, %v187
    %v189 = vpop.f32.mrb[0].mxu0
    %v190 = vpop.f32.mrb[0].mxu0
    %v191 = vpop.f32.mrb[0].mxu0
    %192 = vdwg.mxu0
    %v195 = vunpack.c.l.b16 %v90
    %v196 = vunpack.c.l.b16 %v91
    %v197 = vpack.c.b16 %v196, %v195
    %v200 = vsel %vm100, %v84, 0
    %202 = vmatprep.subr.bf16.mxu0 0
    %203 = vmatpush1.bf16.msra.mxu0 %v197
    %204 = vmatprep.subr.bf16.mxu0 0
    %205 = vmatpush1.bf16.msra.mxu0 0
    %206 = vmatprep.subr.bf16.mxu0 0
    %207 = vmatpush1.bf16.msra.mxu0 0
    %208 = vmatprep.subr.bf16.mxu0 0
    %209 = vmatpush1.bf16.msra.mxu0 0
    %210 = vmatprep.subr.bf16.mxu0 0
    %211 = vmatpush1.bf16.msra.mxu0 0
    %212 = vmatprep.subr.bf16.mxu0 0
    %213 = vmatpush1.bf16.msra.mxu0 0
    %214 = vmatprep.subr.bf16.mxu0 0
    %215 = vmatpush1.bf16.msra.mxu0 0
    %216 = vmatprep.subr.bf16.mxu0 0
    %217 = vmatpush1.bf16.msra.mxu0 0
    %218 = vmatprep.subr.bf16.mxu0 0
    %219 = vmatpush1.bf16.msra.mxu0 0
    %220 = vmatprep.subr.bf16.mxu0 0
    %221 = vmatpush1.bf16.msra.mxu0 0
    %222 = vmatprep.subr.bf16.mxu0 0
    %223 = vmatpush1.bf16.msra.mxu0 0
    %224 = vmatprep.subr.bf16.mxu0 0
    %225 = vmatpush1.bf16.msra.mxu0 0
    %226 = vmatprep.subr.bf16.mxu0 0
    %227 = vmatpush1.bf16.msra.mxu0 0
    %228 = vmatprep.subr.bf16.mxu0 0
    %229 = vmatpush1.bf16.msra.mxu0 0
    %230 = vmatprep.subr.bf16.mxu0 0
    %231 = vmatpush1.bf16.msra.mxu0 0
    %232 = vmatprep.subr.bf16.mxu0 0
    %233 = vmatpush1.bf16.msra.mxu0 0
    %234 = vmatprep.mubr.bf16.mxu0 0
    %235 = vmatmul.mubr.bf16.gmra.mrb[0].mxu0 %v200
    %v236 = vpop.f32.mrb[0].mxu0
    %v237 = vadd.f32 0.0, %v236
    %v238 = vpop.f32.mrb[0].mxu0
    %v239 = vpop.f32.mrb[0].mxu0
    %v240 = vpop.f32.mrb[0].mxu0
    %241 = vdwg.mxu0
    %v244 = vunpack.c.l.b16 %v92
    %v245 = vunpack.c.l.b16 %v93
    %v246 = vpack.c.b16 %v245, %v244
    %v249 = vsel %vm100, %v85, 0
    %251 = vmatprep.subr.bf16.mxu0 0
    %252 = vmatpush1.bf16.msra.mxu0 %v246
    %253 = vmatprep.subr.bf16.mxu0 0
    %254 = vmatpush1.bf16.msra.mxu0 0
    %255 = vmatprep.subr.bf16.mxu0 0
    %256 = vmatpush1.bf16.msra.mxu0 0
    %257 = vmatprep.subr.bf16.mxu0 0
    %258 = vmatpush1.bf16.msra.mxu0 0
    %259 = vmatprep.subr.bf16.mxu0 0
    %260 = vmatpush1.bf16.msra.mxu0 0
    %261 = vmatprep.subr.bf16.mxu0 0
    %262 = vmatpush1.bf16.msra.mxu0 0
    %263 = vmatprep.subr.bf16.mxu0 0
    %264 = vmatpush1.bf16.msra.mxu0 0
    %265 = vmatprep.subr.bf16.mxu0 0
    %266 = vmatpush1.bf16.msra.mxu0 0
    %267 = vmatprep.subr.bf16.mxu0 0
    %268 = vmatpush1.bf16.msra.mxu0 0
    %269 = vmatprep.subr.bf16.mxu0 0
    %270 = vmatpush1.bf16.msra.mxu0 0
    %271 = vmatprep.subr.bf16.mxu0 0
    %272 = vmatpush1.bf16.msra.mxu0 0
    %273 = vmatprep.subr.bf16.mxu0 0
    %274 = vmatpush1.bf16.msra.mxu0 0
    %275 = vmatprep.subr.bf16.mxu0 0
    %276 = vmatpush1.bf16.msra.mxu0 0
    %277 = vmatprep.subr.bf16.mxu0 0
    %278 = vmatpush1.bf16.msra.mxu0 0
    %279 = vmatprep.subr.bf16.mxu0 0
    %280 = vmatpush1.bf16.msra.mxu0 0
    %281 = vmatprep.subr.bf16.mxu0 0
    %282 = vmatpush1.bf16.msra.mxu0 0
    %283 = vmatprep.mubr.bf16.mxu0 0
    %284 = vmatmul.mubr.bf16.gmra.mrb[0].mxu0 %v249
    %v285 = vpop.f32.mrb[0].mxu0
    %v286 = vadd.f32 0.0, %v285
    %v287 = vpop.f32.mrb[0].mxu0
    %v288 = vpop.f32.mrb[0].mxu0
    %v289 = vpop.f32.mrb[0].mxu0
    %290 = vdwg.mxu0
    %vm291 = vcmask 261120
    %v292 = vsel %vm291, %v139, 0.0
    %v293 = vsel %vm291, %v188, 0.0
    %v294 = vadd.f32 %v292, %v293
    %v295 = vsel %vm291, %v237, 0.0
    %v296 = vadd.f32 %v294, %v295
    %v297 = vsel %vm291, %v286, 0.0
    %v298 = vadd.f32 %v296, %v297
    %299 = vst.msk [vmem:[#allocation7] sm:$0xff] %vm291, %v298
    // Predicated region
    $region18: #{tpu_custom_call.1} parent=1 // pred_check
      _
    $region19: #{tpu_custom_call.1} parent=1 // pred_check_branch
      %301 = sbr.rel (0) target = $region21
    $region20: #{tpu_custom_call.1} parent=1 // pred_region
      %s303 = ssub.s32 128, 128
      %304 = vsyncadd [#allocation4], %s303
      %s306 = sshll.u32 [#allocation7], 4
      %s307 = int_to_ptr.vmem [resolvable:$true] %s306
      %309 = dma.vmem_to_hbm [thread:$0]  %s307, 128, %s2, [#allocation4]
    $region21: #{tpu_custom_call.1} parent=1 // pred_fallthru
      _
    // Predicated region
    $region22: #{tpu_custom_call.1} parent=1 // pred_check
      _
    $region23: #{tpu_custom_call.1} parent=1 // pred_check_branch
      %311 = sbr.rel (0) target = $region25
    $region24: #{tpu_custom_call.1} parent=1 // pred_region
      %312 = dma.done [#allocation4], 128
    $region25: #{tpu_custom_call.1} parent=1 // pred_fallthru
      _
    %313 = vsyncpa [#allocation3], 1
    %314 = vsyncpa [#allocation6], 1
    %315 = vsyncpa [#allocation4], 1

</llo_original>
